<compile_context>
chip_gen: v6e
topology: v6e:2x2x1
jax: 0.10.0
libtpu: 0.0.40
codegen_flags: <defaults>
</compile_context>

<pallas_src>
import jax
import jax.numpy as jnp
from jax.experimental import pallas as pl
from jax.experimental.pallas import tpu as pltpu

_POSE_N = 72
_BETA_N = 300
_TRANS_N = 3
_SCALE_N = 1
_TOTAL = _POSE_N + _BETA_N + _TRANS_N + _SCALE_N        # 376
_PADDED = 512                                           # next multiple of 128


def _smpl_params_kernel(slab_ref, slab_out):
    # Entire forward semantics: identity copy of the fused parameter slab.
    # (With input_output_aliases the output buffer is the input buffer; the
    # explicit copy keeps the body well-defined and costs one vld + one vst.)
    slab_out[...] = slab_ref[...]


def _passthrough_slab(slab):
    return pl.pallas_call(
        _smpl_params_kernel,
        out_shape=jax.ShapeDtypeStruct(slab.shape, slab.dtype),
        in_specs=[pl.BlockSpec(memory_space=pltpu.MemorySpace.VMEM)],
        out_specs=pl.BlockSpec(memory_space=pltpu.MemorySpace.VMEM),
        # Output aliases input: no extra output allocation / writeback.
        input_output_aliases={0: 0},
    )(slab)


def optimization_smpl_forward(pose, beta, trans, scale):
    """Returns (pose, beta, trans, scale) exactly like the nn.Module forward."""
    # Fuse the four tiny parameters into one lane-dense (1, 512) slab.
    slab = jnp.concatenate(
        [
            pose.reshape(1, _POSE_N),
            beta.reshape(1, _BETA_N),
            trans.reshape(1, _TRANS_N),
            scale.reshape(1, _SCALE_N),
        ],
        axis=-1,
    )
    slab = jnp.pad(slab, ((0, 0), (0, _PADDED - _TOTAL)))

    out_slab = _passthrough_slab(slab)

    # Split back into the module's four outputs (wrapper-side slices).
    o_pose = out_slab[:, :_POSE_N]
    o_beta = out_slab[:, _POSE_N:_POSE_N + _BETA_N]
    o_trans = out_slab[:, _POSE_N + _BETA_N:_POSE_N + _BETA_N + _TRANS_N]
    o_scale = out_slab[:, _POSE_N + _BETA_N + _TRANS_N]       # shape (1,)
    return o_pose, o_beta, o_trans, o_scale


def init_optimization_smpl_params():
    """Deterministic parameter init matching OptimizationSMPL.__init__."""
    pose = jnp.zeros((1, _POSE_N), dtype=jnp.float32)
    beta = jnp.zeros((1, _BETA_N), dtype=jnp.float32)
    trans = jnp.zeros((1, _TRANS_N), dtype=jnp.float32)
    scale = jnp.ones((_SCALE_N,), dtype=jnp.float32) * 90.0
    return pose, beta, trans, scale


if __name__ == "__main__":
    # Forward takes no inputs; parameters are initialized deterministically
    # per __init__ (zeros / ones*90). PRNGKey kept only for the deterministic-
    # setup convention.
    _ = jax.random.PRNGKey(0)

    pose, beta, trans, scale = init_optimization_smpl_params()

    out_pose, out_beta, out_trans, out_scale = jax.block_until_ready(
        optimization_smpl_forward(pose, beta, trans, scale)
    )

    assert out_pose.shape == (1, 72) and out_pose.dtype == jnp.float32
    assert out_beta.shape == (1, 300) and out_beta.dtype == jnp.float32
    assert out_trans.shape == (1, 3) and out_trans.dtype == jnp.float32
    assert out_scale.shape == (1,) and out_scale.dtype == jnp.float32
    assert bool(jnp.all(out_pose == 0.0))
    assert bool(jnp.all(out_beta == 0.0))
    assert bool(jnp.all(out_trans == 0.0))
    assert bool(jnp.all(out_scale == 90.0))

    print("KERNEL_OK")
</pallas_src>

<mosaic_0001>
module attributes {stable_mosaic.version = 11 : i64} {
  func.func @_smpl_params_kernel(%arg0: memref<1x512xf32, #tpu.memory_space<vmem>>, %arg1: memref<1x512xf32, #tpu.memory_space<vmem>>) attributes {dimension_semantics = [], scalar_prefetch = 0 : i64, scratch_operands = 0 : i64, tpu.core_type = #tpu.core_type<tc>} {
    %c0 = arith.constant 0 : index
    %c0_0 = arith.constant 0 : index
    %0 = vector.load %arg0[%c0, %c0_0] : memref<1x512xf32, #tpu.memory_space<vmem>>, vector<1x512xf32>
    %c0_1 = arith.constant 0 : index
    %c0_2 = arith.constant 0 : index
    %1 = vector.load %arg1[%c0_1, %c0_2] : memref<1x512xf32, #tpu.memory_space<vmem>>, vector<1x512xf32>
    tpu.vector_store %arg1[%c0_1, %c0_2], %0 {strides = array<i32>} : memref<1x512xf32, #tpu.memory_space<vmem>>, vector<1x512xf32>,
    return
  }
}

</mosaic_0001>

<llo_original>
// kernel: tpu_custom_call.1
$region0: #{tpu_custom_call.1}
  #allocation0 [shape = 'u32[]', space=smem, size = 0x4, offset = 0x4, fixed_abs, tag = 'smem constant byte address 0x4 - core index']
  #allocation1 [shape = 'u32[144,128]{1,0:T(1,128)}', space=vmem, size = 0x12000, scoped, tag = 'internal scratch']
  %s0 = inlined_call_operand.hbm [shape: f32[1,512], index: 0, kind: input, shape index: {}, may-alias: {0,1}]
  %s1 = inlined_call_operand.hbm [shape: f32[1,512], index: 1, kind: output, shape index: {}, may-alias: {0,1}]
  %s2 = sld [smem:[#allocation0]]
  $region18: #{tpu_custom_call.1} parent=0
    _
  %s4 = ssub.s32 1, %s2
  %s5 = scalar_select 0, %s4, %s2
  $region1: #{tpu_custom_call.1} parent=0
    #allocation2 [shape = 'u8[2048]{0}', space=vmem, size = 0x800, scoped, tag = 'input window, operand 0, single buffered']
    #allocation3 [shape = 's32[1]{0}', space=sflag, size = 0x4, scoped, tag = 'scoped memory for tpu_custom_call.1']
    #allocation4 [shape = 's32[1]{0}', space=sflag, size = 0x4, scoped, tag = 'scoped memory for tpu_custom_call.1']
    #allocation5 [shape = 'u8[2048]{0}', space=vmem, size = 0x800, scoped, tag = 'output window, operand 0, single buffered']
    %6 = vsyncpa [#allocation3], 0
    %7 = vsyncpa [#allocation4], 0
    // Predicated region
    $region2: #{tpu_custom_call.1} parent=1 // pred_check
      _
    $region3: #{tpu_custom_call.1} parent=1 // pred_check_branch
      %9 = sbr.rel (0) target = $region5
    $region4: #{tpu_custom_call.1} parent=1 // pred_region
      %s11 = ssub.s32 64, 64
      %12 = vsyncadd [#allocation3], %s11
      %s14 = sshll.u32 [#allocation2], 4
      %s15 = int_to_ptr.vmem [resolvable:$true] %s14
      %17 = dma.hbm_to_vmem [thread:$0]  %s0, 64, %s15, [#allocation3]
    $region5: #{tpu_custom_call.1} parent=1 // pred_fallthru
      _
    // Predicated region
    $region6: #{tpu_custom_call.1} parent=1 // pred_check
      _
    $region7: #{tpu_custom_call.1} parent=1 // pred_check_branch
      %19 = sbr.rel (0) target = $region9
    $region8: #{tpu_custom_call.1} parent=1 // pred_region
      %20 = dma.done [#allocation3], 64
    $region9: #{tpu_custom_call.1} parent=1 // pred_fallthru
      _
    %v21 = vld [vmem:[#allocation2] sm:$0xf]
    %v22 = vlaneseq
    %vm23 = vcmp.ge.s32.totalorder %v22, 0
    %vm24 = vcmp.lt.s32.totalorder %v22, 512
    %vm25 = vmand %vm23, %vm24
    %26 = vst.msk [vmem:[#allocation5] sm:$0xf] %vm25, %v21
    // Predicated region
    $region10: #{tpu_custom_call.1} parent=1 // pred_check
      _
    $region11: #{tpu_custom_call.1} parent=1 // pred_check_branch
      %28 = sbr.rel (0) target = $region13
    $region12: #{tpu_custom_call.1} parent=1 // pred_region
      %s30 = ssub.s32 64, 64
      %31 = vsyncadd [#allocation4], %s30
      %s33 = sshll.u32 [#allocation5], 4
      %s34 = int_to_ptr.vmem [resolvable:$true] %s33
      %36 = dma.vmem_to_hbm [thread:$0]  %s34, 64, %s1, [#allocation4]
    $region13: #{tpu_custom_call.1} parent=1 // pred_fallthru
      _
    // Predicated region
    $region14: #{tpu_custom_call.1} parent=1 // pred_check
      _
    $region15: #{tpu_custom_call.1} parent=1 // pred_check_branch
      %38 = sbr.rel (0) target = $region17
    $region16: #{tpu_custom_call.1} parent=1 // pred_region
      %39 = dma.done [#allocation4], 64
    $region17: #{tpu_custom_call.1} parent=1 // pred_fallthru
      _
    %40 = vsyncpa [#allocation3], 1
    %41 = vsyncpa [#allocation4], 1

</llo_original>
